<compile_context>
chip_gen: v5e
topology: v5e:2x2
jax: 0.10.0
libtpu: 0.0.40
codegen_flags: <defaults>
</compile_context>

<pallas_src>
import functools

import jax
import jax.numpy as jnp
from jax.experimental import pallas as pl
from jax.experimental.pallas import tpu as pltpu


# ------------------------------ Pallas kernel -------------------------------

def _conv_block_kernel(*refs, use_bn, use_res, use_act, eps):
    """Fused conv (single MXU matmul) + bias + BN(train) + residual + ReLU.

    Shapes (all whole arrays, resident in VMEM, lane axis = N*H*W):
      patches : (k*k*cin, N*H*W)  bf16   im2col patch slab
      w       : (cout, k*k*cin)   bf16   repacked conv weight
      bias, gamma, beta : (cout, 1) f32
      xres    : (cin, N*H*W)      f32    (only when use_res)
      out     : (cout, N*H*W)     f32
    """
    if use_res:
        patches_ref, w_ref, bias_ref, gamma_ref, beta_ref, xres_ref, o_ref = refs
    else:
        patches_ref, w_ref, bias_ref, gamma_ref, beta_ref, o_ref = refs

    # Conv as ONE lane-dense MXU matmul with f32 accumulation.
    conv = jnp.dot(w_ref[...], patches_ref[...],
                   preferred_element_type=jnp.float32)        # (cout, N*H*W) f32
    conv = conv + bias_ref[...]                                # (cout,1) broadcast

    if use_bn:
        # Training-mode BatchNorm2d: per-channel batch stats over all N*H*W
        # positions, computed in-register (centered sum of squares for
        # numerical stability) and applied in the same kernel.
        inv_m = 1.0 / conv.shape[1]
        mean = jnp.sum(conv, axis=1, keepdims=True) * inv_m    # (cout, 1)
        cent = conv - mean
        var = jnp.sum(cent * cent, axis=1, keepdims=True) * inv_m
        scale = gamma_ref[...] * jax.lax.rsqrt(var + eps)      # (cout, 1)
        conv = cent * scale + beta_ref[...]

    if use_res:
        conv = conv + xres_ref[...]                            # residual in f32

    if use_act:
        conv = jnp.maximum(conv, 0.0)                          # ReLU

    o_ref[...] = conv


def conv_block_call(patches, w_slab, bias, gamma, beta, xres, *,
                    use_bn, use_res, use_act, eps):
    """Single fused pallas_call over the whole (tiny) batch."""
    cout = w_slab.shape[0]
    np_cols = patches.shape[1]
    kern = functools.partial(_conv_block_kernel, use_bn=use_bn,
                             use_res=use_res, use_act=use_act, eps=eps)
    args = [patches, w_slab, bias, gamma, beta]
    if use_res:
        args.append(xres)
    vmem = lambda: pl.BlockSpec(memory_space=pltpu.MemorySpace.VMEM)
    return pl.pallas_call(
        kern,
        out_shape=jax.ShapeDtypeStruct((cout, np_cols), jnp.float32),
        in_specs=[vmem() for _ in args],
        out_specs=vmem(),
    )(*args)


# ----------------------- XLA-side layout prep (tiny) ------------------------

def _im2col(xp, k, Ho, Wo):
    """(N, C, Hp, Wp) padded NCHW -> (k*k*C, N*Ho*Wo), tap-major/channel rows."""
    N, C = xp.shape[0], xp.shape[1]
    wins = [xp[:, :, kh:kh + Ho, kw:kw + Wo]
            for kh in range(k) for kw in range(k)]           # 9 x (N,C,Ho,Wo)
    pat = jnp.stack(wins, axis=0)                            # (T, N, C, Ho, Wo)
    pat = jnp.transpose(pat, (0, 2, 1, 3, 4))                # (T, C, N, Ho, Wo)
    return pat.reshape(k * k * C, N * Ho * Wo)


# --------------------------- Conv_Block equivalent ---------------------------

class ConvBlock:
    """Equivalent of the PyTorch Conv_Block.forward on NCHW feature maps."""

    def __init__(self, layer_name, config, key):
        self.layer_name = layer_name
        self.reuse_times = config.get('reuse_times', 1)   # stored; used by caller
        self.use_residual = config['use_residual']
        self.use_bn = config['use_bn']
        self.use_activation = config['use_activation']
        if self.use_activation not in (None, 'ReLU'):
            # TODO(synk): only ReLU implemented in the fused kernel.
            raise NotImplementedError(self.use_activation)
        p = config['parameters']
        self.cin = p['in_channels']
        self.cout = p['out_channels']
        self.k = p['kernel_size']
        self.pad = p.get('padding', 0)
        if self.use_residual and self.cin != self.cout:
            raise ValueError("use_residual requires in_channels == out_channels")

        k1, k2 = jax.random.split(key)
        fan_in = self.cin * self.k * self.k
        bound = 1.0 / (fan_in ** 0.5)
        weight = jax.random.uniform(
            k1, (self.cout, self.cin, self.k, self.k), jnp.float32, -bound, bound)
        bias = jax.random.uniform(k2, (self.cout,), jnp.float32, -bound, bound)

        # Hoisted weight repack: (cout,cin,kh,kw) -> (cout, k*k*cin) bf16 slab,
        # row order matching the im2col tap-major / channel-minor contraction.
        self.w_slab = jnp.transpose(weight, (0, 2, 3, 1)).reshape(
            self.cout, self.k * self.k * self.cin).astype(jnp.bfloat16)
        self.bias_col = bias.reshape(self.cout, 1)
        self.gamma_col = jnp.ones((self.cout, 1), jnp.float32)
        self.beta_col = jnp.zeros((self.cout, 1), jnp.float32)
        self.eps = 1e-5

    def __call__(self, feats):
        x = feats[list(feats)[-1]]                       # last inserted (N,C,H,W)
        N, C, H, W = x.shape
        Ho = H + 2 * self.pad - self.k + 1
        Wo = W + 2 * self.pad - self.k + 1

        # Exact PyTorch branch semantics: the activation is only applied when
        # use_residual is also True (the act-and-not-residual case falls
        # through all if/elifs and leaves feat unchanged).
        apply_res = self.use_residual
        apply_act = (self.use_activation is not None) and self.use_residual
        if apply_res:
            assert self.cin == self.cout and Ho == H and Wo == W

        # Tiny XLA-side prep, fused under jit: zero-pad, lane-dense im2col,
        # one bf16 cast, flat f32 residual view.
        xp = jnp.pad(x, ((0, 0), (0, 0),
                         (self.pad, self.pad), (self.pad, self.pad)))
        patches = _im2col(xp, self.k, Ho, Wo).astype(jnp.bfloat16)  # (K, N*P)
        xres = (jnp.transpose(x, (1, 0, 2, 3)).reshape(C, N * H * W)
                if apply_res else None)

        out = conv_block_call(patches, self.w_slab, self.bias_col,
                              self.gamma_col, self.beta_col, xres,
                              use_bn=self.use_bn, use_res=apply_res,
                              use_act=apply_act, eps=self.eps)       # (cout, N*P)

        feat = jnp.transpose(out.reshape(self.cout, N, Ho, Wo), (1, 0, 2, 3))
        feats[self.layer_name] = feat                    # back to (N, cout, H, W)
        return feats


# --------------------------------- main -------------------------------------

if __name__ == "__main__":
    conv1_cfg = {'type': 'conv', 'reuse_times': 2, 'use_residual': True,
                 'use_bn': True, 'use_activation': 'ReLU',
                 'parameters': {'in_channels': 4, 'out_channels': 4,
                                'kernel_size': 3, 'padding': 1}}
    conv2_cfg = {'type': 'conv', 'reuse_times': 1, 'use_residual': False,
                 'use_bn': False, 'use_activation': None,
                 'parameters': {'in_channels': 4, 'out_channels': 4,
                                'kernel_size': 3, 'padding': 1}}

    key = jax.random.PRNGKey(0)
    kx, k1, k2 = jax.random.split(key, 3)
    x_nchw = jax.random.normal(kx, (2, 4, 16, 16), jnp.float32)   # NCHW input

    block1 = ConvBlock('conv1', conv1_cfg, k1)   # BN + residual + ReLU, reused 2x
    block2 = ConvBlock('conv2', conv2_cfg, k2)   # plain conv + bias

    @jax.jit
    def forward(x):
        feats = {'input': x}                      # NCHW end to end, no transposes
        for _ in range(block1.reuse_times):       # same-weight reuse
            feats = block1(feats)
        feats = block2(feats)
        return feats

    out = forward(x_nchw)
    jax.block_until_ready(out)
    print("KERNEL_OK")
</pallas_src>

<mosaic_0001>
module attributes {stable_mosaic.version = 11 : i64} {
  func.func @_conv_block_kernel(%arg0: memref<36x512xbf16, #tpu.memory_space<vmem>>, %arg1: memref<4x36xbf16, #tpu.memory_space<vmem>>, %arg2: memref<4x1xf32, #tpu.memory_space<vmem>>, %arg3: memref<4x1xf32, #tpu.memory_space<vmem>>, %arg4: memref<4x1xf32, #tpu.memory_space<vmem>>, %arg5: memref<4x512xf32, #tpu.memory_space<vmem>>, %arg6: memref<4x512xf32, #tpu.memory_space<vmem>>) attributes {dimension_semantics = [], scalar_prefetch = 0 : i64, scratch_operands = 0 : i64, tpu.core_type = #tpu.core_type<tc>} {
    %c0 = arith.constant 0 : index
    %c0_0 = arith.constant 0 : index
    %0 = vector.load %arg1[%c0, %c0_0] : memref<4x36xbf16, #tpu.memory_space<vmem>>, vector<4x36xbf16>
    %c0_1 = arith.constant 0 : index
    %c0_2 = arith.constant 0 : index
    %1 = vector.load %arg0[%c0_1, %c0_2] : memref<36x512xbf16, #tpu.memory_space<vmem>>, vector<36x512xbf16>
    %cst = arith.constant dense<0.000000e+00> : vector<4x512xf32>
    %2 = tpu.matmul %0, %1, %cst {dimension_numbers = #tpu.dot_dimension_numbers<[1], [0], [0], [1], [0, 0, 1, 1], [], []>} : vector<4x36xbf16>, vector<36x512xbf16>, vector<4x512xf32> -> vector<4x512xf32>
    %c0_3 = arith.constant 0 : index
    %c0_4 = arith.constant 0 : index
    %3 = vector.load %arg2[%c0_3, %c0_4] : memref<4x1xf32, #tpu.memory_space<vmem>>, vector<4x1xf32>
    %4 = vector.broadcast %3 : vector<4x1xf32> to vector<4x512xf32>
    %5 = arith.addf %2, %4 : vector<4x512xf32>
    %cst_5 = arith.constant dense<0.000000e+00> : vector<4xf32>
    %6 = vector.multi_reduction <add>, %5, %cst_5 [1] : vector<4x512xf32> to vector<4xf32>
    %7 = vector.shape_cast %6 : vector<4xf32> to vector<4x1xf32>
    %cst_6 = arith.constant 0.001953125 : f32
    %8 = vector.broadcast %cst_6 : f32 to vector<4x1xf32>
    %9 = arith.mulf %7, %8 : vector<4x1xf32>
    %10 = vector.broadcast %9 : vector<4x1xf32> to vector<4x512xf32>
    %11 = arith.subf %5, %10 : vector<4x512xf32>
    %12 = arith.mulf %11, %11 : vector<4x512xf32>
    %cst_7 = arith.constant dense<0.000000e+00> : vector<4xf32>
    %13 = vector.multi_reduction <add>, %12, %cst_7 [1] : vector<4x512xf32> to vector<4xf32>
    %14 = vector.shape_cast %13 : vector<4xf32> to vector<4x1xf32>
    %cst_8 = arith.constant 0.001953125 : f32
    %15 = vector.broadcast %cst_8 : f32 to vector<4x1xf32>
    %16 = arith.mulf %14, %15 : vector<4x1xf32>
    %c0_9 = arith.constant 0 : index
    %c0_10 = arith.constant 0 : index
    %17 = vector.load %arg3[%c0_9, %c0_10] : memref<4x1xf32, #tpu.memory_space<vmem>>, vector<4x1xf32>
    %cst_11 = arith.constant 9.99999974E-6 : f32
    %18 = vector.broadcast %cst_11 : f32 to vector<4x1xf32>
    %19 = arith.addf %16, %18 : vector<4x1xf32>
    %20 = math.rsqrt %19 : vector<4x1xf32>
    %21 = arith.mulf %17, %20 : vector<4x1xf32>
    %22 = vector.broadcast %21 : vector<4x1xf32> to vector<4x512xf32>
    %23 = arith.mulf %11, %22 : vector<4x512xf32>
    %c0_12 = arith.constant 0 : index
    %c0_13 = arith.constant 0 : index
    %24 = vector.load %arg4[%c0_12, %c0_13] : memref<4x1xf32, #tpu.memory_space<vmem>>, vector<4x1xf32>
    %25 = vector.broadcast %24 : vector<4x1xf32> to vector<4x512xf32>
    %26 = arith.addf %23, %25 : vector<4x512xf32>
    %c0_14 = arith.constant 0 : index
    %c0_15 = arith.constant 0 : index
    %27 = vector.load %arg5[%c0_14, %c0_15] : memref<4x512xf32, #tpu.memory_space<vmem>>, vector<4x512xf32>
    %28 = arith.addf %26, %27 : vector<4x512xf32>
    %cst_16 = arith.constant 0.000000e+00 : f32
    %29 = vector.broadcast %cst_16 : f32 to vector<4x512xf32>
    %30 = arith.maximumf %28, %29 : vector<4x512xf32>
    %c0_17 = arith.constant 0 : index
    %c0_18 = arith.constant 0 : index
    %31 = vector.load %arg6[%c0_17, %c0_18] : memref<4x512xf32, #tpu.memory_space<vmem>>, vector<4x512xf32>
    tpu.vector_store %arg6[%c0_17, %c0_18], %30 {strides = array<i32>} : memref<4x512xf32, #tpu.memory_space<vmem>>, vector<4x512xf32>,
    return
  }
}

module attributes {stable_mosaic.version = 11 : i64} {
  func.func @_conv_block_kernel(%arg0: memref<36x512xbf16, #tpu.memory_space<vmem>>, %arg1: memref<4x36xbf16, #tpu.memory_space<vmem>>, %arg2: memref<4x1xf32, #tpu.memory_space<vmem>>, %arg3: memref<4x1xf32, #tpu.memory_space<vmem>>, %arg4: memref<4x1xf32, #tpu.memory_space<vmem>>, %arg5: memref<4x512xf32, #tpu.memory_space<vmem>>) attributes {dimension_semantics = [], scalar_prefetch = 0 : i64, scratch_operands = 0 : i64, tpu.core_type = #tpu.core_type<tc>} {
    %c0 = arith.constant 0 : index
    %c0_0 = arith.constant 0 : index
    %0 = vector.load %arg1[%c0, %c0_0] : memref<4x36xbf16, #tpu.memory_space<vmem>>, vector<4x36xbf16>
    %c0_1 = arith.constant 0 : index
    %c0_2 = arith.constant 0 : index
    %1 = vector.load %arg0[%c0_1, %c0_2] : memref<36x512xbf16, #tpu.memory_space<vmem>>, vector<36x512xbf16>
    %cst = arith.constant dense<0.000000e+00> : vector<4x512xf32>
    %2 = tpu.matmul %0, %1, %cst {dimension_numbers = #tpu.dot_dimension_numbers<[1], [0], [0], [1], [0, 0, 1, 1], [], []>} : vector<4x36xbf16>, vector<36x512xbf16>, vector<4x512xf32> -> vector<4x512xf32>
    %c0_3 = arith.constant 0 : index
    %c0_4 = arith.constant 0 : index
    %3 = vector.load %arg2[%c0_3, %c0_4] : memref<4x1xf32, #tpu.memory_space<vmem>>, vector<4x1xf32>
    %4 = vector.broadcast %3 : vector<4x1xf32> to vector<4x512xf32>
    %5 = arith.addf %2, %4 : vector<4x512xf32>
    %c0_5 = arith.constant 0 : index
    %c0_6 = arith.constant 0 : index
    %6 = vector.load %arg5[%c0_5, %c0_6] : memref<4x512xf32, #tpu.memory_space<vmem>>, vector<4x512xf32>
    tpu.vector_store %arg5[%c0_5, %c0_6], %5 {strides = array<i32>} : memref<4x512xf32, #tpu.memory_space<vmem>>, vector<4x512xf32>,
    return
  }
}

</mosaic_0001>

<llo_original>
// kernel: forward.3
$region0: #{forward.3}
  #allocation0 [shape = 'u32[]', space=smem, size = 0x4, offset = 0x4, fixed_abs, tag = 'smem constant byte address 0x4 - core index']
  #allocation1 [shape = 'u32[72,128]{1,0:T(1,128)}', space=vmem, size = 0x9000, scoped, tag = 'internal scratch']
  %s0 = inlined_call_operand.vmem [shape: bf16[36,512], index: 0, kind: input, shape index: {}]
  %s1 = inlined_call_operand.vmem [shape: bf16[4,36], index: 1, kind: input, shape index: {}]
  %s2 = inlined_call_operand.vmem [shape: f32[4,1], index: 2, kind: input, shape index: {}]
  %s3 = inlined_call_operand.vmem [shape: f32[4,1], index: 3, kind: input, shape index: {}]
  %s4 = inlined_call_operand.vmem [shape: f32[4,1], index: 4, kind: input, shape index: {}]
  %s5 = inlined_call_operand.vmem [shape: f32[4,512], index: 5, kind: input, shape index: {}]
  %s6 = inlined_call_operand.vmem [shape: f32[4,512], index: 6, kind: output, shape index: {}]
  %s7 = sld [smem:[#allocation0]]
  $region34: #{forward.3} parent=0
    _
  %s9 = ssub.s32 1, %s7
  %s10 = scalar_select 0, %s9, %s7
  // Predicated region
  $region2: #{forward.3} parent=0 // pred_check
    _
  $region3: #{forward.3} parent=0 // pred_check_branch
    %12 = sbr.rel (0) target = $region5
  $region4: #{forward.3} parent=0 // pred_region
    _
  $region5: #{forward.3} parent=0 // pred_fallthru
    _
  // Predicated region
  $region6: #{forward.3} parent=0 // pred_check
    _
  $region7: #{forward.3} parent=0 // pred_check_branch
    %14 = sbr.rel (0) target = $region9
  $region8: #{forward.3} parent=0 // pred_region
    _
  $region9: #{forward.3} parent=0 // pred_fallthru
    _
  // Predicated region
  $region10: #{forward.3} parent=0 // pred_check
    _
  $region11: #{forward.3} parent=0 // pred_check_branch
    %16 = sbr.rel (0) target = $region13
  $region12: #{forward.3} parent=0 // pred_region
    _
  $region13: #{forward.3} parent=0 // pred_fallthru
    _
  // Predicated region
  $region14: #{forward.3} parent=0 // pred_check
    _
  $region15: #{forward.3} parent=0 // pred_check_branch
    %18 = sbr.rel (0) target = $region17
  $region16: #{forward.3} parent=0 // pred_region
    _
  $region17: #{forward.3} parent=0 // pred_fallthru
    _
  // Predicated region
  $region18: #{forward.3} parent=0 // pred_check
    _
  $region19: #{forward.3} parent=0 // pred_check_branch
    %20 = sbr.rel (0) target = $region21
  $region20: #{forward.3} parent=0 // pred_region
    _
  $region21: #{forward.3} parent=0 // pred_fallthru
    _
  // Predicated region
  $region22: #{forward.3} parent=0 // pred_check
    _
  $region23: #{forward.3} parent=0 // pred_check_branch
    %22 = sbr.rel (0) target = $region25
  $region24: #{forward.3} parent=0 // pred_region
    _
  $region25: #{forward.3} parent=0 // pred_fallthru
    _
  %v24 = vld [vmem:[%s1] sm:$0x3]
  %v25 = vld [vmem:[%s0] sm:$0xff]
  %v26 = vld [vmem:[%s0 + $0x8] sm:$0xff]
  %v27 = vld [vmem:[%s0 + $0x10] sm:$0xff]
  %v28 = vld [vmem:[%s0 + $0x18] sm:$0xff]
  %v29 = vld [vmem:[%s0 + $0x20] sm:$0xff]
  %v30 = vld [vmem:[%s0 + $0x28] sm:$0xff]
  %v31 = vld [vmem:[%s0 + $0x30] sm:$0xff]
  %v32 = vld [vmem:[%s0 + $0x38] sm:$0xff]
  %v33 = vld [vmem:[%s0 + $0x40] sm:$0x33]
  %v34 = vld [vmem:[%s0 + $0x48] sm:$0x33]
  %v35 = vld [vmem:[%s2] sm:$0xf]
  %37 = vset.pattern.permute.xlu0 0
  %38 = vperm.xlu0 %37, %v35
  %v39 = vpop.permute.xlu0 %38
  %v51 = vunpack.c.l.b16 %v25
  %v52 = vunpack.c.h.b16 %v25
  %v53 = vunpack.c.l.b16 %v26
  %v54 = vunpack.c.h.b16 %v26
  %v55 = vunpack.c.l.b16 %v27
  %v56 = vunpack.c.h.b16 %v27
  %v57 = vunpack.c.l.b16 %v28
  %v58 = vunpack.c.h.b16 %v28
  %v59 = vunpack.c.l.b16 %v29
  %v60 = vunpack.c.h.b16 %v29
  %v61 = vunpack.c.l.b16 %v30
  %v62 = vunpack.c.h.b16 %v30
  %v63 = vunpack.c.l.b16 %v31
  %v64 = vunpack.c.h.b16 %v31
  %v65 = vunpack.c.l.b16 %v32
  %v66 = vunpack.c.h.b16 %v32
  %v67 = vunpack.c.l.b16 %v33
  %v68 = vunpack.c.h.b16 %v33
  %v69 = vunpack.c.l.b16 %v34
  %v70 = vunpack.c.h.b16 %v34
  %v71 = vpack.c.b16 %v55, %v51
  %v72 = vpack.c.b16 %v56, %v52
  %v73 = vpack.c.b16 %v57, %v53
  %v74 = vpack.c.b16 %v58, %v54
  %v75 = vpack.c.b16 %v63, %v59
  %v76 = vpack.c.b16 %v64, %v60
  %v77 = vpack.c.b16 %v65, %v61
  %v78 = vpack.c.b16 %v66, %v62
  %v79 = vpack.c.b16 %v67, %v67
  %v80 = vpack.c.b16 %v68, %v68
  %v81 = vpack.c.b16 %v69, %v69
  %v82 = vpack.c.b16 %v70, %v70
  %vm91 = vcmask 293888
  %v93 = vsel %vm91, %v24, 0
  %vm95 = vcmask 1041408
  %v97 = vsel %vm95, %v79, 0
  %v100 = vsel %vm95, %v80, 0
  %v103 = vsel %vm95, %v81, 0
  %v106 = vsel %vm95, %v82, 0
  %108 = vmatpush.bf16.msra.mxu0 0
  %109 = vmatpush.bf16.msra.mxu0 0
  %110 = vmatpush.bf16.msra.mxu0 0
  %111 = vmatpush.bf16.msra.mxu0 0
  %112 = vmatpush.bf16.msra.mxu0 0
  %113 = vmatpush.bf16.msra.mxu0 %v97
  %114 = vmatpush.bf16.msra.mxu0 %v75
  %115 = vmatpush.bf16.msra.mxu0 %v71
  %116 = vmatmul.bf16.gmra.mxu0 %v93
  %v117 = vpop.f32.mrf.mxu0
  %v118 = vadd.f32 %v39, %v117
  %v119 = vpop.f32.mrf.mxu0
  %120 = vdwg.mxu0
  %121 = vmatpush.bf16.msra.mxu0 0
  %122 = vmatpush.bf16.msra.mxu0 0
  %123 = vmatpush.bf16.msra.mxu0 0
  %124 = vmatpush.bf16.msra.mxu0 0
  %125 = vmatpush.bf16.msra.mxu0 0
  %126 = vmatpush.bf16.msra.mxu0 %v100
  %127 = vmatpush.bf16.msra.mxu0 %v76
  %128 = vmatpush.bf16.msra.mxu0 %v72
  %129 = vmatmul.bf16.gmra.mxu0 %v93
  %v130 = vpop.f32.mrf.mxu0
  %v131 = vadd.f32 %v39, %v130
  %v132 = vpop.f32.mrf.mxu0
  %133 = vdwg.mxu0
  %134 = vmatpush.bf16.msra.mxu0 0
  %135 = vmatpush.bf16.msra.mxu0 0
  %136 = vmatpush.bf16.msra.mxu0 0
  %137 = vmatpush.bf16.msra.mxu0 0
  %138 = vmatpush.bf16.msra.mxu0 0
  %139 = vmatpush.bf16.msra.mxu0 %v103
  %140 = vmatpush.bf16.msra.mxu0 %v77
  %141 = vmatpush.bf16.msra.mxu0 %v73
  %142 = vmatmul.bf16.gmra.mxu0 %v93
  %v143 = vpop.f32.mrf.mxu0
  %v144 = vadd.f32 %v39, %v143
  %v145 = vpop.f32.mrf.mxu0
  %146 = vdwg.mxu0
  %147 = vmatpush.bf16.msra.mxu0 0
  %148 = vmatpush.bf16.msra.mxu0 0
  %149 = vmatpush.bf16.msra.mxu0 0
  %150 = vmatpush.bf16.msra.mxu0 0
  %151 = vmatpush.bf16.msra.mxu0 0
  %152 = vmatpush.bf16.msra.mxu0 %v106
  %153 = vmatpush.bf16.msra.mxu0 %v78
  %154 = vmatpush.bf16.msra.mxu0 %v74
  %155 = vmatmul.bf16.gmra.mxu0 %v93
  %v156 = vpop.f32.mrf.mxu0
  %v157 = vadd.f32 %v39, %v156
  %v158 = vpop.f32.mrf.mxu0
  %159 = vdwg.mxu0
  %vm160 = vcmask 1043456
  %v161 = vsel %vm160, %v118, 0.0
  %v162 = vsel %vm160, %v131, 0.0
  %v163 = vadd.f32 %v161, %v162
  %v164 = vsel %vm160, %v144, 0.0
  %v165 = vadd.f32 %v163, %v164
  %v166 = vsel %vm160, %v157, 0.0
  %v167 = vadd.f32 %v165, %v166
  %168 = vadd.xlane.f32.xlu0 %v167
  %v169 = vpop.xlane.xlu0 %168
  %v170 = vmul.f32 %v169, 0.001953125
  %v171 = vsub.f32 %v118, %v170
  %v172 = vsub.f32 %v131, %v170
  %v173 = vsub.f32 %v144, %v170
  %v174 = vsub.f32 %v157, %v170
  %v175 = vmul.f32 %v171, %v171
  %v176 = vmul.f32 %v172, %v172
  %v177 = vmul.f32 %v173, %v173
  %v178 = vmul.f32 %v174, %v174
  %v179 = vsel %vm160, %v175, 0.0
  %v180 = vsel %vm160, %v176, 0.0
  %v181 = vadd.f32 %v179, %v180
  %v182 = vsel %vm160, %v177, 0.0
  %v183 = vadd.f32 %v181, %v182
  %v184 = vsel %vm160, %v178, 0.0
  %v185 = vadd.f32 %v183, %v184
  %186 = vadd.xlane.f32.xlu0 %v185
  %v187 = vpop.xlane.xlu0 %186
  %v188 = vmul.f32 %v187, 0.001953125
  %v189 = vld [vmem:[%s3] sm:$0xf]
  %v190 = vadd.f32 %v188, 1e-05
  %v191 = vrsqrt.pop %v190
  %v192 = vmul.f32 %v191, %v190
  %v193 = vmul.f32 %v192, %v191
  %v194 = vmul.f32 0.5, %v193
  %v195 = vsub.f32 1.5, %v194
  %v196 = vmul.f32 %v191, %v195
  %vm197 = vweird.f32 %v190
  %vm198 = vweird.f32 %v191
  %vm199 = vmor %vm197, %vm198
  %v200 = vsel %vm199, %v191, %v196
  %v201 = vmul.f32 %v189, %v200
  %203 = vset.pattern.permute.xlu0 0
  %204 = vperm.xlu0 %203, %v201
  %v205 = vpop.permute.xlu0 %204
  %v207 = vmul.f32 %v171, %v205
  %v208 = vmul.f32 %v172, %v205
  %v209 = vmul.f32 %v173, %v205
  %v210 = vmul.f32 %v174, %v205
  %v211 = vld [vmem:[%s4] sm:$0xf]
  %213 = vset.pattern.permute.xlu0 0
  %214 = vperm.xlu0 %213, %v211
  %v215 = vpop.permute.xlu0 %214
  %v217 = vadd.f32 %v207, %v215
  %v218 = vadd.f32 %v208, %v215
  %v219 = vadd.f32 %v209, %v215
  %v220 = vadd.f32 %v210, %v215
  %v221 = vld [vmem:[%s5] sm:$0xff]
  %v222 = vld [vmem:[%s5 + $0x8] sm:$0xff]
  %225 = vst [vmem:[#allocation1] ss:$2 sm:$0xff] %v221
  %s226 = scalar_lea.vmem [#allocation1], 16
  %227 = vst [vmem:[%s226] ss:$2 sm:$0xff] %v222
  %v228 = vld.sshfl [vmem:[#allocation1] sm:$0xff pattern:$0x75316420]
  %v229 = vld.sshfl [vmem:[#allocation1 + $0x8] sm:$0xff pattern:$0x75316420]
  %v230 = vld.sshfl [vmem:[#allocation1 + $0x10] sm:$0xff pattern:$0x75316420]
  %v231 = vld.sshfl [vmem:[#allocation1 + $0x18] sm:$0xff pattern:$0x75316420]
  %v236 = vadd.f32 %v217, %v228
  %v237 = vadd.f32 %v218, %v229
  %v238 = vadd.f32 %v219, %v230
  %v239 = vadd.f32 %v220, %v231
  %v240 = vmax.f32 %v236, 0.0
  %v241 = vmax.f32 %v237, 0.0
  %v242 = vmax.f32 %v238, 0.0
  %v243 = vmax.f32 %v239, 0.0
  %v248 = vrot.slane %v241, 4
  %v249 = vrot.slane %v243, 4
  %v250 = vsel %vm160, %v240, %v248
  %v251 = vsel %vm160, %v242, %v249
  %254 = vst [vmem:[%s6] sm:$0xff] %v250
  %255 = vst [vmem:[%s6 + $0x8] sm:$0xff] %v251
  // Predicated region
  $region26: #{forward.3} parent=0 // pred_check
    _
  $region27: #{forward.3} parent=0 // pred_check_branch
    %257 = sbr.rel (0) target = $region29
  $region28: #{forward.3} parent=0 // pred_region
    _
  $region29: #{forward.3} parent=0 // pred_fallthru
    _
  // Predicated region
  $region30: #{forward.3} parent=0 // pred_check
    _
  $region31: #{forward.3} parent=0 // pred_check_branch
    %259 = sbr.rel (0) target = $region33
  $region32: #{forward.3} parent=0 // pred_region
    _
  $region33: #{forward.3} parent=0 // pred_fallthru
    _

// kernel: forward.5
$region0: #{forward.5}
  #allocation0 [shape = 'u32[]', space=smem, size = 0x4, offset = 0x4, fixed_abs, tag = 'smem constant byte address 0x4 - core index']
  #allocation1 [shape = 'u32[72,128]{1,0:T(1,128)}', space=vmem, size = 0x9000, scoped, tag = 'internal scratch']
  %s0 = inlined_call_operand.vmem [shape: bf16[36,512], index: 0, kind: input, shape index: {}]
  %s1 = inlined_call_operand.vmem [shape: bf16[4,36], index: 1, kind: input, shape index: {}]
  %s2 = inlined_call_operand.vmem [shape: f32[4,1], index: 2, kind: input, shape index: {}]
  %s3 = inlined_call_operand.vmem [shape: f32[4,1], index: 3, kind: input, shape index: {}]
  %s4 = inlined_call_operand.vmem [shape: f32[4,1], index: 4, kind: input, shape index: {}]
  %s5 = inlined_call_operand.vmem [shape: f32[4,512], index: 5, kind: output, shape index: {}]
  %s6 = sld [smem:[#allocation0]]
  $region30: #{forward.5} parent=0
    _
  %s8 = ssub.s32 1, %s6
  %s9 = scalar_select 0, %s8, %s6
  // Predicated region
  $region2: #{forward.5} parent=0 // pred_check
    _
  $region3: #{forward.5} parent=0 // pred_check_branch
    %11 = sbr.rel (0) target = $region5
  $region4: #{forward.5} parent=0 // pred_region
    _
  $region5: #{forward.5} parent=0 // pred_fallthru
    _
  // Predicated region
  $region6: #{forward.5} parent=0 // pred_check
    _
  $region7: #{forward.5} parent=0 // pred_check_branch
    %13 = sbr.rel (0) target = $region9
  $region8: #{forward.5} parent=0 // pred_region
    _
  $region9: #{forward.5} parent=0 // pred_fallthru
    _
  // Predicated region
  $region10: #{forward.5} parent=0 // pred_check
    _
  $region11: #{forward.5} parent=0 // pred_check_branch
    %15 = sbr.rel (0) target = $region13
  $region12: #{forward.5} parent=0 // pred_region
    _
  $region13: #{forward.5} parent=0 // pred_fallthru
    _
  // Predicated region
  $region14: #{forward.5} parent=0 // pred_check
    _
  $region15: #{forward.5} parent=0 // pred_check_branch
    %17 = sbr.rel (0) target = $region17
  $region16: #{forward.5} parent=0 // pred_region
    _
  $region17: #{forward.5} parent=0 // pred_fallthru
    _
  // Predicated region
  $region18: #{forward.5} parent=0 // pred_check
    _
  $region19: #{forward.5} parent=0 // pred_check_branch
    %19 = sbr.rel (0) target = $region21
  $region20: #{forward.5} parent=0 // pred_region
    _
  $region21: #{forward.5} parent=0 // pred_fallthru
    _
  %v21 = vld [vmem:[%s1] sm:$0x3]
  %v22 = vld [vmem:[%s0] sm:$0xff]
  %v23 = vld [vmem:[%s0 + $0x8] sm:$0xff]
  %v24 = vld [vmem:[%s0 + $0x10] sm:$0xff]
  %v25 = vld [vmem:[%s0 + $0x18] sm:$0xff]
  %v26 = vld [vmem:[%s0 + $0x20] sm:$0xff]
  %v27 = vld [vmem:[%s0 + $0x28] sm:$0xff]
  %v28 = vld [vmem:[%s0 + $0x30] sm:$0xff]
  %v29 = vld [vmem:[%s0 + $0x38] sm:$0xff]
  %v30 = vld [vmem:[%s0 + $0x40] sm:$0x33]
  %v31 = vld [vmem:[%s0 + $0x48] sm:$0x33]
  %v32 = vld [vmem:[%s2] sm:$0xf]
  %34 = vset.pattern.permute.xlu0 0
  %35 = vperm.xlu0 %34, %v32
  %v36 = vpop.permute.xlu0 %35
  %v48 = vunpack.c.l.b16 %v22
  %v49 = vunpack.c.h.b16 %v22
  %v50 = vunpack.c.l.b16 %v23
  %v51 = vunpack.c.h.b16 %v23
  %v52 = vunpack.c.l.b16 %v24
  %v53 = vunpack.c.h.b16 %v24
  %v54 = vunpack.c.l.b16 %v25
  %v55 = vunpack.c.h.b16 %v25
  %v56 = vunpack.c.l.b16 %v26
  %v57 = vunpack.c.h.b16 %v26
  %v58 = vunpack.c.l.b16 %v27
  %v59 = vunpack.c.h.b16 %v27
  %v60 = vunpack.c.l.b16 %v28
  %v61 = vunpack.c.h.b16 %v28
  %v62 = vunpack.c.l.b16 %v29
  %v63 = vunpack.c.h.b16 %v29
  %v64 = vunpack.c.l.b16 %v30
  %v65 = vunpack.c.h.b16 %v30
  %v66 = vunpack.c.l.b16 %v31
  %v67 = vunpack.c.h.b16 %v31
  %v68 = vpack.c.b16 %v52, %v48
  %v69 = vpack.c.b16 %v53, %v49
  %v70 = vpack.c.b16 %v54, %v50
  %v71 = vpack.c.b16 %v55, %v51
  %v72 = vpack.c.b16 %v60, %v56
  %v73 = vpack.c.b16 %v61, %v57
  %v74 = vpack.c.b16 %v62, %v58
  %v75 = vpack.c.b16 %v63, %v59
  %v76 = vpack.c.b16 %v64, %v64
  %v77 = vpack.c.b16 %v65, %v65
  %v78 = vpack.c.b16 %v66, %v66
  %v79 = vpack.c.b16 %v67, %v67
  %vm88 = vcmask 293888
  %v90 = vsel %vm88, %v21, 0
  %vm92 = vcmask 1041408
  %v94 = vsel %vm92, %v76, 0
  %v97 = vsel %vm92, %v77, 0
  %v100 = vsel %vm92, %v78, 0
  %v103 = vsel %vm92, %v79, 0
  %105 = vmatpush.bf16.msra.mxu0 0
  %106 = vmatpush.bf16.msra.mxu0 0
  %107 = vmatpush.bf16.msra.mxu0 0
  %108 = vmatpush.bf16.msra.mxu0 0
  %109 = vmatpush.bf16.msra.mxu0 0
  %110 = vmatpush.bf16.msra.mxu0 %v94
  %111 = vmatpush.bf16.msra.mxu0 %v72
  %112 = vmatpush.bf16.msra.mxu0 %v68
  %113 = vmatmul.bf16.gmra.mxu0 %v90
  %v114 = vpop.f32.mrf.mxu0
  %v115 = vadd.f32 %v36, %v114
  %v116 = vpop.f32.mrf.mxu0
  %117 = vdwg.mxu0
  %118 = vmatpush.bf16.msra.mxu0 0
  %119 = vmatpush.bf16.msra.mxu0 0
  %120 = vmatpush.bf16.msra.mxu0 0
  %121 = vmatpush.bf16.msra.mxu0 0
  %122 = vmatpush.bf16.msra.mxu0 0
  %123 = vmatpush.bf16.msra.mxu0 %v97
  %124 = vmatpush.bf16.msra.mxu0 %v73
  %125 = vmatpush.bf16.msra.mxu0 %v69
  %126 = vmatmul.bf16.gmra.mxu0 %v90
  %v127 = vpop.f32.mrf.mxu0
  %v128 = vadd.f32 %v36, %v127
  %v129 = vpop.f32.mrf.mxu0
  %130 = vdwg.mxu0
  %131 = vmatpush.bf16.msra.mxu0 0
  %132 = vmatpush.bf16.msra.mxu0 0
  %133 = vmatpush.bf16.msra.mxu0 0
  %134 = vmatpush.bf16.msra.mxu0 0
  %135 = vmatpush.bf16.msra.mxu0 0
  %136 = vmatpush.bf16.msra.mxu0 %v100
  %137 = vmatpush.bf16.msra.mxu0 %v74
  %138 = vmatpush.bf16.msra.mxu0 %v70
  %139 = vmatmul.bf16.gmra.mxu0 %v90
  %v140 = vpop.f32.mrf.mxu0
  %v141 = vadd.f32 %v36, %v140
  %v142 = vpop.f32.mrf.mxu0
  %143 = vdwg.mxu0
  %144 = vmatpush.bf16.msra.mxu0 0
  %145 = vmatpush.bf16.msra.mxu0 0
  %146 = vmatpush.bf16.msra.mxu0 0
  %147 = vmatpush.bf16.msra.mxu0 0
  %148 = vmatpush.bf16.msra.mxu0 0
  %149 = vmatpush.bf16.msra.mxu0 %v103
  %150 = vmatpush.bf16.msra.mxu0 %v75
  %151 = vmatpush.bf16.msra.mxu0 %v71
  %152 = vmatmul.bf16.gmra.mxu0 %v90
  %v153 = vpop.f32.mrf.mxu0
  %v154 = vadd.f32 %v36, %v153
  %v155 = vpop.f32.mrf.mxu0
  %156 = vdwg.mxu0
  %v161 = vrot.slane %v128, 4
  %v162 = vrot.slane %v154, 4
  %vm163 = vcmask 1043456
  %v164 = vsel %vm163, %v115, %v161
  %v165 = vsel %vm163, %v141, %v162
  %168 = vst [vmem:[%s5] sm:$0xff] %v164
  %169 = vst [vmem:[%s5 + $0x8] sm:$0xff] %v165
  // Predicated region
  $region22: #{forward.5} parent=0 // pred_check
    _
  $region23: #{forward.5} parent=0 // pred_check_branch
    %171 = sbr.rel (0) target = $region25
  $region24: #{forward.5} parent=0 // pred_region
    _
  $region25: #{forward.5} parent=0 // pred_fallthru
    _
  // Predicated region
  $region26: #{forward.5} parent=0 // pred_check
    _
  $region27: #{forward.5} parent=0 // pred_check_branch
    %173 = sbr.rel (0) target = $region29
  $region28: #{forward.5} parent=0 // pred_region
    _
  $region29: #{forward.5} parent=0 // pred_fallthru
    _

</llo_original>
